<compile_context>
chip_gen: v5e
topology: v5e:2x2
jax: 0.10.0
libtpu: 0.0.40
codegen_flags: <defaults>
</compile_context>

<pallas_src>
import jax
import jax.numpy as jnp
from jax.experimental import pallas as pl
from jax.experimental.pallas import tpu as pltpu


def _round_up(x, m):
    return (x + m - 1) // m * m


def _pooler_start_logits_kernel(x_ref, w_ref, b_ref, o_ref):
    # x arrives in its native dtype; cast to the MXU operand dtype in VMEM
    # right before the matmul, accumulate in f32, add bias in f32.
    x = x_ref[...].astype(w_ref.dtype)
    acc = jnp.dot(x, w_ref[...], preferred_element_type=jnp.float32)
    o_ref[...] = (acc + b_ref[...]).astype(o_ref.dtype)


def pooler_start_logits(hidden_states, params, p_mask=None, *, tm=512,
                        mxu_dtype=jnp.bfloat16):
    """hidden_states: (..., H); params = (w: (H, C), b: (C,) or (1, C)).

    p_mask is accepted for API parity but ignored — the reference PyTorch
    forward ignores it as well.
    # TODO(synk): the upstream HuggingFace PoolerStartLogits additionally
    # applies `x = x*(1-p_mask) - 1e30*p_mask`; fuse it here if that variant
    # is ever needed (free VPU work under this HBM-bound kernel).
    Use mxu_dtype=jnp.float32 for a bit-exact (non-bf16) matmul path.
    """
    del p_mask
    w, b = params
    H = hidden_states.shape[-1]
    assert w.shape[0] == H, "weight in_features must match hidden size"
    C = w.shape[1]

    lead_shape = hidden_states.shape[:-1]
    x2d = hidden_states.reshape(-1, H)          # native dtype, no extra pass
    M = x2d.shape[0]
    x_bytes = jnp.dtype(x2d.dtype).itemsize

    # Minimum lane-dense output width; do NOT widen past 128.
    C_pad = _round_up(C, 128)

    # ---- Row-tile selection -------------------------------------------------
    # Multiple of 16 (bf16 sublane packing), clamped to M, shrunk to fit a
    # conservative double-buffer VMEM budget (safe on v5e/v6e/v7x).
    tm_eff = max(16, min(_round_up(tm, 16), _round_up(M, 16)))
    vmem_budget = 28 * 1024 * 1024
    per_row_bytes = 2 * H * x_bytes + 2 * C_pad * 4   # x + out, double buffered
    while tm_eff > 16 and tm_eff * per_row_bytes > vmem_budget:
        tm_eff = max(16, (tm_eff // 2) // 16 * 16)

    # Keep the row grid at >= 2 steps when there is enough work: v7x has two
    # TensorCores and dimension_semantics=("parallel",) shards the grid.
    if M > 32 and pl.cdiv(M, tm_eff) < 2:
        tm_eff = max(16, _round_up(pl.cdiv(M, 2), 16))

    grid = (pl.cdiv(M, tm_eff),)

    # ---- Weight / bias prep (tiny, one-time) --------------------------------
    w_p = w.astype(mxu_dtype)
    b_p = jnp.reshape(b, (1, C)).astype(jnp.float32)
    if C_pad != C:
        w_p = jnp.pad(w_p, ((0, 0), (0, C_pad - C)))
        b_p = jnp.pad(b_p, ((0, 0), (0, C_pad - C)))

    # ---- Explicit scoped-VMEM limit (v5e default is only 16 MiB) ------------
    vmem_need = (tm_eff * per_row_bytes
                 + H * C_pad * jnp.dtype(mxu_dtype).itemsize
                 + C_pad * 4)
    vmem_limit = int(min(48 * 1024 * 1024,
                         max(32 * 1024 * 1024, vmem_need + (4 << 20))))

    out2d = pl.pallas_call(
        _pooler_start_logits_kernel,
        out_shape=jax.ShapeDtypeStruct((M, C_pad), jnp.float32),
        grid_spec=pltpu.PrefetchScalarGridSpec(
            num_scalar_prefetch=0,
            grid=grid,
            in_specs=[
                pl.BlockSpec((tm_eff, H), lambda i: (i, 0)),        # x rows
                pl.BlockSpec((H, C_pad), lambda i: (0, 0),
                             pipeline_mode=pl.Buffered(1)),          # W resident
                pl.BlockSpec((1, C_pad), lambda i: (0, 0),
                             pipeline_mode=pl.Buffered(1)),          # b resident
            ],
            out_specs=pl.BlockSpec((tm_eff, C_pad), lambda i: (i, 0)),
        ),
        compiler_params=pltpu.CompilerParams(
            dimension_semantics=("parallel",),
            vmem_limit_bytes=vmem_limit),
    )(x2d, w_p, b_p)

    # Keep this slice adjacent to the pallas_call: padded class lanes are
    # garbage and must never be reduced over before slicing.
    out = out2d[:, :C]
    return out.reshape(*lead_shape, C)


def _reference_f32(hidden_states, params):
    w, b = params
    return hidden_states.astype(jnp.float32) @ w + jnp.reshape(b, (-1,))


def _reference_bf16(hidden_states, params):
    # Same operand quantization as the kernel (bf16 products, f32 accumulate).
    w, b = params
    x = hidden_states.astype(jnp.bfloat16).astype(jnp.float32)
    wq = w.astype(jnp.bfloat16).astype(jnp.float32)
    return x @ wq + jnp.reshape(b, (-1,)).astype(jnp.float32)


def init_params(key, hidden_size, num_classes):
    kw, kb = jax.random.split(key)
    scale = 1.0 / jnp.sqrt(hidden_size)
    # stored (in, out); torch Linear stores (out, in) but math is identical.
    w = jax.random.uniform(kw, (hidden_size, num_classes), jnp.float32,
                           -scale, scale)
    b = jax.random.uniform(kb, (num_classes,), jnp.float32, -scale, scale)
    return (w, b)


if __name__ == "__main__":
    key = jax.random.PRNGKey(0)
    B, S, hidden_size, num_classes = 2, 8, 32, 5

    kx, kp = jax.random.split(key)
    hidden_states = jax.random.normal(kx, (B, S, hidden_size), jnp.float32)
    params = init_params(kp, hidden_size, num_classes)

    out = pooler_start_logits(hidden_states, params)
    out = jax.block_until_ready(out)
    assert out.shape == (B, S, num_classes)

    # Tight check vs a reference with matching bf16 operand quantization.
    ref_q = _reference_bf16(hidden_states, params)
    assert jnp.allclose(out, ref_q, atol=1e-4, rtol=1e-4), \
        "mismatch vs bf16-operand reference"

    # Looser semantic check vs the full-f32 PyTorch-equivalent reference.
    ref = _reference_f32(hidden_states, params)
    assert jnp.allclose(out, ref, atol=5e-2, rtol=5e-2), \
        "mismatch vs f32 reference"

    print("KERNEL_OK")
</pallas_src>

<mosaic_0001>
module attributes {stable_mosaic.version = 11 : i64} {
  func.func @_pooler_start_logits_kernel(%arg0: i32, %arg1: memref<16x32xf32, #tpu.memory_space<vmem>>, %arg2: memref<32x128xbf16, #tpu.memory_space<vmem>>, %arg3: memref<1x128xf32, #tpu.memory_space<vmem>>, %arg4: memref<16x128xf32, #tpu.memory_space<vmem>>) attributes {dimension_semantics = [#tpu.dimension_semantics<parallel>], iteration_bounds = array<i64: 1>, scalar_prefetch = 0 : i64, scratch_operands = 0 : i64, tpu.core_type = #tpu.core_type<tc>, window_params = [{transform_indices = @transform_0, window_bounds = array<i64: 16, 32>}, {pipeline_mode = #tpu.pipeline_mode<synchronous>, transform_indices = @transform_1, window_bounds = array<i64: 32, 128>}, {pipeline_mode = #tpu.pipeline_mode<synchronous>, transform_indices = @transform_2, window_bounds = array<i64: 1, 128>}, {transform_indices = @transform_3, window_bounds = array<i64: 16, 128>}]} {
    %c0 = arith.constant 0 : index
    %c0_0 = arith.constant 0 : index
    %0 = vector.load %arg1[%c0, %c0_0] : memref<16x32xf32, #tpu.memory_space<vmem>>, vector<16x32xf32>
    %1 = arith.truncf %0 : vector<16x32xf32> to vector<16x32xbf16>
    %c0_1 = arith.constant 0 : index
    %c0_2 = arith.constant 0 : index
    %2 = vector.load %arg2[%c0_1, %c0_2] : memref<32x128xbf16, #tpu.memory_space<vmem>>, vector<32x128xbf16>
    %cst = arith.constant dense<0.000000e+00> : vector<16x128xf32>
    %3 = tpu.matmul %1, %2, %cst {dimension_numbers = #tpu.dot_dimension_numbers<[1], [0], [0], [1], [0, 0, 1, 1], [], []>} : vector<16x32xbf16>, vector<32x128xbf16>, vector<16x128xf32> -> vector<16x128xf32>
    %c0_3 = arith.constant 0 : index
    %c0_4 = arith.constant 0 : index
    %4 = vector.load %arg3[%c0_3, %c0_4] : memref<1x128xf32, #tpu.memory_space<vmem>>, vector<1x128xf32>
    %5 = vector.broadcast %4 : vector<1x128xf32> to vector<16x128xf32>
    %6 = arith.addf %3, %5 : vector<16x128xf32>
    %c0_5 = arith.constant 0 : index
    %c0_6 = arith.constant 0 : index
    %7 = vector.load %arg4[%c0_5, %c0_6] : memref<16x128xf32, #tpu.memory_space<vmem>>, vector<16x128xf32>
    tpu.vector_store %arg4[%c0_5, %c0_6], %6 {strides = array<i32>} : memref<16x128xf32, #tpu.memory_space<vmem>>, vector<16x128xf32>,
    return
  }
  func.func @transform_0(%arg0: i32) -> (i32, i32) {
    %c0_i32 = arith.constant 0 : i32
    %c0_i32_0 = arith.constant 0 : i32
    return %arg0, %c0_i32 : i32, i32
  }
  func.func @transform_1(%arg0: i32) -> (i32, i32) {
    %c0_i32 = arith.constant 0 : i32
    %c0_i32_0 = arith.constant 0 : i32
    %c0_i32_1 = arith.constant 0 : i32
    return %c0_i32, %c0_i32_0 : i32, i32
  }
  func.func @transform_2(%arg0: i32) -> (i32, i32) {
    %c0_i32 = arith.constant 0 : i32
    %c0_i32_0 = arith.constant 0 : i32
    %c0_i32_1 = arith.constant 0 : i32
    return %c0_i32, %c0_i32_0 : i32, i32
  }
  func.func @transform_3(%arg0: i32) -> (i32, i32) {
    %c0_i32 = arith.constant 0 : i32
    %c0_i32_0 = arith.constant 0 : i32
    return %arg0, %c0_i32 : i32, i32
  }
}

</mosaic_0001>

<llo_original>
// kernel: tpu_custom_call.1
$region0: #{tpu_custom_call.1}
  #allocation0 [shape = 'u32[]', space=smem, size = 0x4, offset = 0x4, fixed_abs, tag = 'smem constant byte address 0x4 - core index']
  #allocation1 [shape = 'u32[72,128]{1,0:T(1,128)}', space=vmem, size = 0x9000, scoped, tag = 'internal scratch']
  %s0 = inlined_call_operand.hbm [shape: f32[16,32], index: 0, kind: input, shape index: {}]
  %s1 = inlined_call_operand.hbm [shape: bf16[32,128], index: 1, kind: input, shape index: {}]
  %s2 = inlined_call_operand.vmem [shape: f32[1,128], index: 2, kind: input, shape index: {}]
  %s3 = inlined_call_operand.hbm [shape: f32[16,128], index: 3, kind: output, shape index: {}]
  %s4 = sld [smem:[#allocation0]]
  $region30: #{tpu_custom_call.1} parent=0
    _
  %s6 = ssub.s32 1, %s4
  %s7 = scalar_select 0, %s6, %s4
  $region1: #{tpu_custom_call.1} parent=0
    #allocation2 [shape = 'u8[8192]{0}', space=vmem, size = 0x2000, scoped, tag = 'input window, operand 0, single buffered']
    #allocation3 [shape = 's32[1]{0}', space=sflag, size = 0x4, scoped, tag = 'scoped memory for tpu_custom_call.1']
    #allocation4 [shape = 's32[1]{0}', space=sflag, size = 0x4, scoped, tag = 'scoped memory for tpu_custom_call.1']
    #allocation5 [shape = 'u8[8192]{0}', space=vmem, size = 0x2000, scoped, tag = 'input window, operand 1, single buffered']
    #allocation6 [shape = 's32[1]{0}', space=sflag, size = 0x4, scoped, tag = 'scoped memory for tpu_custom_call.1']
    #allocation7 [shape = 'u8[8192]{0}', space=vmem, size = 0x2000, scoped, tag = 'output window, operand 0, single buffered']
    %8 = vsyncpa [#allocation3], 0
    %9 = vsyncpa [#allocation6], 0
    %10 = vsyncpa [#allocation4], 0
    // Predicated region
    $region2: #{tpu_custom_call.1} parent=1 // pred_check
      _
    $region3: #{tpu_custom_call.1} parent=1 // pred_check_branch
      %12 = sbr.rel (0) target = $region5
    $region4: #{tpu_custom_call.1} parent=1 // pred_region
      %14 = vsyncadd [#allocation3], 0
      %s15 = sshll.u32 %s0, 4
      %s16 = int_to_ptr.hbm [resolvable:$true] %s15
      %s17 = sshll.u32 [#allocation2], 4
      %s18 = int_to_ptr.vmem [resolvable:$true] %s17
      %23 = dma.hbm_to_vmem [thread:$0]  %s16, 256, %s18, [#allocation3], 128, 128, 8
    $region5: #{tpu_custom_call.1} parent=1 // pred_fallthru
      _
    // Predicated region
    $region6: #{tpu_custom_call.1} parent=1 // pred_check
      _
    $region7: #{tpu_custom_call.1} parent=1 // pred_check_branch
      %25 = sbr.rel (0) target = $region9
    $region8: #{tpu_custom_call.1} parent=1 // pred_region
      %27 = vsyncadd [#allocation6], 0
      %s28 = sshll.u32 %s1, 4
      %s29 = int_to_ptr.hbm [resolvable:$true] %s28
      %s30 = sshll.u32 [#allocation5], 4
      %s31 = int_to_ptr.vmem [resolvable:$true] %s30
      %36 = dma.hbm_to_vmem [thread:$0]  %s29, 256, %s31, [#allocation6], 64, 64, 4
    $region9: #{tpu_custom_call.1} parent=1 // pred_fallthru
      _
    // Predicated region
    $region10: #{tpu_custom_call.1} parent=1 // pred_check
      _
    $region11: #{tpu_custom_call.1} parent=1 // pred_check_branch
      %38 = sbr.rel (0) target = $region13
    $region12: #{tpu_custom_call.1} parent=1 // pred_region
      _
    $region13: #{tpu_custom_call.1} parent=1 // pred_fallthru
      _
    // Predicated region
    $region14: #{tpu_custom_call.1} parent=1 // pred_check
      _
    $region15: #{tpu_custom_call.1} parent=1 // pred_check_branch
      %40 = sbr.rel (0) target = $region17
    $region16: #{tpu_custom_call.1} parent=1 // pred_region
      %42 = dma.done [#allocation3], 256
    $region17: #{tpu_custom_call.1} parent=1 // pred_fallthru
      _
    // Predicated region
    $region18: #{tpu_custom_call.1} parent=1 // pred_check
      _
    $region19: #{tpu_custom_call.1} parent=1 // pred_check_branch
      %44 = sbr.rel (0) target = $region21
    $region20: #{tpu_custom_call.1} parent=1 // pred_region
      %46 = dma.done [#allocation6], 256
    $region21: #{tpu_custom_call.1} parent=1 // pred_fallthru
      _
    %v48 = vld [vmem:[#allocation2] sm:$0xff]
    %v49 = vld [vmem:[#allocation2 + $0x8] sm:$0xff]
    %v50 = vpack.c.bf16 %v49, %v48
    %v51 = vld [vmem:[#allocation5] sm:$0xf]
    %v52 = vld [vmem:[#allocation5 + $0x4] sm:$0xf]
    %v53 = vld [vmem:[#allocation5 + $0x8] sm:$0xf]
    %v54 = vld [vmem:[#allocation5 + $0xc] sm:$0xf]
    %v55 = vld [vmem:[%s2] sm:$0x1]
    %v57 = vperm.slane %v55, 0
    %v63 = vunpack.c.l.b16 %v51
    %v64 = vunpack.c.l.b16 %v52
    %v65 = vunpack.c.l.b16 %v53
    %v66 = vunpack.c.l.b16 %v54
    %v67 = vpack.c.b16 %v64, %v63
    %v68 = vpack.c.b16 %v66, %v65
    %vm71 = vcmask 261120
    %v73 = vsel %vm71, %v50, 0
    %75 = vmatpush.bf16.msra.mxu0 0
    %76 = vmatpush.bf16.msra.mxu0 0
    %77 = vmatpush.bf16.msra.mxu0 0
    %78 = vmatpush.bf16.msra.mxu0 0
    %79 = vmatpush.bf16.msra.mxu0 0
    %80 = vmatpush.bf16.msra.mxu0 0
    %81 = vmatpush.bf16.msra.mxu0 %v68
    %82 = vmatpush.bf16.msra.mxu0 %v67
    %83 = vmatmul.bf16.gmra.mxu0 %v73
    %v84 = vpop.f32.mrf.mxu0
    %v85 = vadd.f32 %v57, %v84
    %v86 = vpop.f32.mrf.mxu0
    %v87 = vadd.f32 %v57, %v86
    %88 = vdwg.mxu0
    %89 = vst [vmem:[#allocation7] sm:$0xff] %v85
    %90 = vst [vmem:[#allocation7 + $0x8] sm:$0xff] %v87
    // Predicated region
    $region22: #{tpu_custom_call.1} parent=1 // pred_check
      _
    $region23: #{tpu_custom_call.1} parent=1 // pred_check_branch
      %92 = sbr.rel (0) target = $region25
    $region24: #{tpu_custom_call.1} parent=1 // pred_region
      %94 = vsyncadd [#allocation4], 0
      %s95 = sshll.u32 [#allocation7], 4
      %s96 = int_to_ptr.vmem [resolvable:$true] %s95
      %s97 = sshll.u32 %s3, 4
      %s98 = int_to_ptr.hbm [resolvable:$true] %s97
      %103 = dma.vmem_to_hbm [thread:$0]  %s96, 256, %s98, [#allocation4], 128, 128, 8
    $region25: #{tpu_custom_call.1} parent=1 // pred_fallthru
      _
    // Predicated region
    $region26: #{tpu_custom_call.1} parent=1 // pred_check
      _
    $region27: #{tpu_custom_call.1} parent=1 // pred_check_branch
      %105 = sbr.rel (0) target = $region29
    $region28: #{tpu_custom_call.1} parent=1 // pred_region
      %107 = dma.done [#allocation4], 256
    $region29: #{tpu_custom_call.1} parent=1 // pred_fallthru
      _
    %108 = vsyncpa [#allocation3], 1
    %109 = vsyncpa [#allocation6], 1
    %110 = vsyncpa [#allocation4], 1

</llo_original>
